<compile_context>
chip_gen: v5e
topology: v5e:2x2
jax: 0.10.0
libtpu: 0.0.40
codegen_flags: <defaults>
</compile_context>

<pallas_src>
import jax
import jax.numpy as jnp
from jax.experimental import pallas as pl
from jax.experimental.pallas import tpu as pltpu

ENCODING_DIMS = [80, 60, 40, 20]
PAD = 128        # lane width: every layer dim padded to this


def _round_up(x, m):
    return ((x + m - 1) // m) * m


def _layer_dims(input_dim, encoding_dims):
    """(in_dim, out_dim) for all 9 Linear layers in forward order."""
    dims = []
    in_dim = input_dim
    for d in encoding_dims:                      # encoder
        dims.append((in_dim, d))
        in_dim = d
    for d in reversed(encoding_dims):            # decoder hidden layers
        dims.append((in_dim, d))
        in_dim = d
    dims.append((in_dim, input_dim))             # final decoder linear
    return dims


def _sae_kernel(x_ref, w_ref, b_ref, out_ref):
    """x_ref: (TILE_B, 128) f32. w_ref: (L, 128, 128) bf16. b_ref: (L, 1, 128) f32.
    out_ref: (TILE_B, 128) f32. ReLU after every layer except the last."""
    n_layers = w_ref.shape[0]
    h = x_ref[...].astype(jnp.bfloat16)
    for i in range(n_layers):                    # static, unrolled 9x
        acc = jnp.dot(h, w_ref[i], preferred_element_type=jnp.float32) + b_ref[i]
        if i < n_layers - 1:
            h = jnp.maximum(acc, 0.0).astype(jnp.bfloat16)
        else:
            out_ref[...] = acc.astype(out_ref.dtype)


def stacked_autoencoder(x, weights, biases):
    """x: (B, input_dim) f32. weights[i]: (in_i, out_i) f32 (torch W transposed).
    biases[i]: (1, out_i) f32. Returns (B, input_dim) f32."""
    B, input_dim = x.shape
    n_layers = len(weights)

    # ---- pack + pad parameters once (zeros in padded rows/cols/bias lanes) ----
    w_stack = jnp.zeros((n_layers, PAD, PAD), jnp.float32)
    b_stack = jnp.zeros((n_layers, 1, PAD), jnp.float32)
    for i, (w, b) in enumerate(zip(weights, biases)):
        in_d, out_d = w.shape
        w_stack = w_stack.at[i, :in_d, :out_d].set(w)
        b_stack = b_stack.at[i, :, :out_d].set(b.reshape(1, out_d))
    w_stack = w_stack.astype(jnp.bfloat16)       # cast once at packing time

    # ---- pick batch tile: right-size small batches, amortize large ones ----
    if B <= 512:
        tile_b = max(8, _round_up(B, 8))         # single grid step, no waste
    else:
        tile_b = 256                             # pipelined tiles, MXU-row sized
    b_pad = _round_up(B, tile_b)

    # ---- pad activations: lane-dense 128 features, batch rounded to tile ----
    x_pad = jnp.zeros((b_pad, PAD), jnp.float32).at[:B, :input_dim].set(x)

    grid = (b_pad // tile_b,)
    out = pl.pallas_call(
        _sae_kernel,
        out_shape=jax.ShapeDtypeStruct((b_pad, PAD), jnp.float32),
        grid=grid,
        in_specs=[
            pl.BlockSpec((tile_b, PAD), lambda i: (i, 0)),
            pl.BlockSpec((n_layers, PAD, PAD), lambda i: (0, 0, 0)),   # resident
            pl.BlockSpec((n_layers, 1, PAD), lambda i: (0, 0, 0)),     # resident
        ],
        out_specs=pl.BlockSpec((tile_b, PAD), lambda i: (i, 0)),
        compiler_params=pltpu.CompilerParams(
            dimension_semantics=("parallel",)),
    )(x_pad, w_stack, b_stack)

    return out[:B, :input_dim]


def init_params(key, input_dim, encoding_dims):
    """PyTorch nn.Linear default init: U(-1/sqrt(fan_in), 1/sqrt(fan_in))."""
    dims = _layer_dims(input_dim, encoding_dims)
    weights, biases = [], []
    for (in_d, out_d) in dims:
        key, kw, kb = jax.random.split(key, 3)
        bound = 1.0 / float(jnp.sqrt(jnp.float32(in_d)))
        w = jax.random.uniform(kw, (in_d, out_d), jnp.float32, -bound, bound)
        b = jax.random.uniform(kb, (1, out_d), jnp.float32, -bound, bound)
        weights.append(w)
        biases.append(b)
    return weights, biases


def reference_forward(x, weights, biases):
    """Pure-JAX reference matching the kernel's numerics (bf16 matmul inputs,
    f32 accumulation, f32 bias add, ReLU on all but the last layer)."""
    h = x
    n = len(weights)
    for i, (w, b) in enumerate(zip(weights, biases)):
        h = jnp.dot(h.astype(jnp.bfloat16), w.astype(jnp.bfloat16),
                    preferred_element_type=jnp.float32) + b
        if i < n - 1:
            h = jnp.maximum(h, 0.0)
    return h


if __name__ == "__main__":
    key = jax.random.PRNGKey(0)

    # Small synthetic "gene expression matrix": batch=8 samples, input_dim=96 genes.
    batch, input_dim = 8, 96
    key, kx = jax.random.split(key)
    x = jax.random.normal(kx, (batch, input_dim), jnp.float32)

    weights, biases = init_params(key, input_dim, ENCODING_DIMS)

    out = stacked_autoencoder(x, weights, biases)
    out = jax.block_until_ready(out)

    ref = reference_forward(x, weights, biases)
    assert out.shape == (batch, input_dim)
    assert jnp.allclose(out, ref, atol=2e-2, rtol=2e-2), "mismatch vs reference"

    print("KERNEL_OK")
</pallas_src>

<mosaic_0001>
module attributes {stable_mosaic.version = 11 : i64} {
  func.func @_sae_kernel(%arg0: i32, %arg1: memref<8x128xf32, #tpu.memory_space<vmem>>, %arg2: memref<9x128x128xbf16, #tpu.memory_space<vmem>>, %arg3: memref<9x1x128xf32, #tpu.memory_space<vmem>>, %arg4: memref<8x128xf32, #tpu.memory_space<vmem>>) attributes {dimension_semantics = [#tpu.dimension_semantics<parallel>], iteration_bounds = array<i64: 1>, scalar_prefetch = 0 : i64, scratch_operands = 0 : i64, tpu.core_type = #tpu.core_type<tc>, window_params = [{transform_indices = @transform_0, window_bounds = array<i64: 8, 128>}, {pipeline_mode = #tpu.pipeline_mode<synchronous>, transform_indices = @transform_1, window_bounds = array<i64: 9, 128, 128>}, {pipeline_mode = #tpu.pipeline_mode<synchronous>, transform_indices = @transform_2, window_bounds = array<i64: 9, 1, 128>}, {transform_indices = @transform_3, window_bounds = array<i64: 8, 128>}]} {
    %c0 = arith.constant 0 : index
    %c0_0 = arith.constant 0 : index
    %0 = vector.load %arg1[%c0, %c0_0] : memref<8x128xf32, #tpu.memory_space<vmem>>, vector<8x128xf32>
    %1 = arith.truncf %0 : vector<8x128xf32> to vector<8x128xbf16>
    %c0_1 = arith.constant 0 : index
    %c0_2 = arith.constant 0 : index
    %c0_3 = arith.constant 0 : index
    %2 = vector.load %arg2[%c0_1, %c0_2, %c0_3] : memref<9x128x128xbf16, #tpu.memory_space<vmem>>, vector<1x128x128xbf16>
    %3 = vector.shape_cast %2 : vector<1x128x128xbf16> to vector<128x128xbf16>
    %cst = arith.constant dense<0.000000e+00> : vector<8x128xf32>
    %4 = tpu.matmul %1, %3, %cst {dimension_numbers = #tpu.dot_dimension_numbers<[1], [0], [0], [1], [0, 0, 1, 1], [], []>} : vector<8x128xbf16>, vector<128x128xbf16>, vector<8x128xf32> -> vector<8x128xf32>
    %c0_4 = arith.constant 0 : index
    %c0_5 = arith.constant 0 : index
    %c0_6 = arith.constant 0 : index
    %5 = vector.load %arg3[%c0_4, %c0_5, %c0_6] : memref<9x1x128xf32, #tpu.memory_space<vmem>>, vector<1x1x128xf32>
    %6 = vector.shape_cast %5 : vector<1x1x128xf32> to vector<1x128xf32>
    %7 = vector.broadcast %6 : vector<1x128xf32> to vector<8x128xf32>
    %8 = arith.addf %4, %7 : vector<8x128xf32>
    %cst_7 = arith.constant 0.000000e+00 : f32
    %9 = vector.broadcast %cst_7 : f32 to vector<8x128xf32>
    %10 = arith.maximumf %8, %9 : vector<8x128xf32>
    %11 = arith.truncf %10 : vector<8x128xf32> to vector<8x128xbf16>
    %c1 = arith.constant 1 : index
    %c0_8 = arith.constant 0 : index
    %c0_9 = arith.constant 0 : index
    %12 = vector.load %arg2[%c1, %c0_8, %c0_9] : memref<9x128x128xbf16, #tpu.memory_space<vmem>>, vector<1x128x128xbf16>
    %13 = vector.shape_cast %12 : vector<1x128x128xbf16> to vector<128x128xbf16>
    %cst_10 = arith.constant dense<0.000000e+00> : vector<8x128xf32>
    %14 = tpu.matmul %11, %13, %cst_10 {dimension_numbers = #tpu.dot_dimension_numbers<[1], [0], [0], [1], [0, 0, 1, 1], [], []>} : vector<8x128xbf16>, vector<128x128xbf16>, vector<8x128xf32> -> vector<8x128xf32>
    %c1_11 = arith.constant 1 : index
    %c0_12 = arith.constant 0 : index
    %c0_13 = arith.constant 0 : index
    %15 = vector.load %arg3[%c1_11, %c0_12, %c0_13] : memref<9x1x128xf32, #tpu.memory_space<vmem>>, vector<1x1x128xf32>
    %16 = vector.shape_cast %15 : vector<1x1x128xf32> to vector<1x128xf32>
    %17 = vector.broadcast %16 : vector<1x128xf32> to vector<8x128xf32>
    %18 = arith.addf %14, %17 : vector<8x128xf32>
    %cst_14 = arith.constant 0.000000e+00 : f32
    %19 = vector.broadcast %cst_14 : f32 to vector<8x128xf32>
    %20 = arith.maximumf %18, %19 : vector<8x128xf32>
    %21 = arith.truncf %20 : vector<8x128xf32> to vector<8x128xbf16>
    %c2 = arith.constant 2 : index
    %c0_15 = arith.constant 0 : index
    %c0_16 = arith.constant 0 : index
    %22 = vector.load %arg2[%c2, %c0_15, %c0_16] : memref<9x128x128xbf16, #tpu.memory_space<vmem>>, vector<1x128x128xbf16>
    %23 = vector.shape_cast %22 : vector<1x128x128xbf16> to vector<128x128xbf16>
    %cst_17 = arith.constant dense<0.000000e+00> : vector<8x128xf32>
    %24 = tpu.matmul %21, %23, %cst_17 {dimension_numbers = #tpu.dot_dimension_numbers<[1], [0], [0], [1], [0, 0, 1, 1], [], []>} : vector<8x128xbf16>, vector<128x128xbf16>, vector<8x128xf32> -> vector<8x128xf32>
    %c2_18 = arith.constant 2 : index
    %c0_19 = arith.constant 0 : index
    %c0_20 = arith.constant 0 : index
    %25 = vector.load %arg3[%c2_18, %c0_19, %c0_20] : memref<9x1x128xf32, #tpu.memory_space<vmem>>, vector<1x1x128xf32>
    %26 = vector.shape_cast %25 : vector<1x1x128xf32> to vector<1x128xf32>
    %27 = vector.broadcast %26 : vector<1x128xf32> to vector<8x128xf32>
    %28 = arith.addf %24, %27 : vector<8x128xf32>
    %cst_21 = arith.constant 0.000000e+00 : f32
    %29 = vector.broadcast %cst_21 : f32 to vector<8x128xf32>
    %30 = arith.maximumf %28, %29 : vector<8x128xf32>
    %31 = arith.truncf %30 : vector<8x128xf32> to vector<8x128xbf16>
    %c3 = arith.constant 3 : index
    %c0_22 = arith.constant 0 : index
    %c0_23 = arith.constant 0 : index
    %32 = vector.load %arg2[%c3, %c0_22, %c0_23] : memref<9x128x128xbf16, #tpu.memory_space<vmem>>, vector<1x128x128xbf16>
    %33 = vector.shape_cast %32 : vector<1x128x128xbf16> to vector<128x128xbf16>
    %cst_24 = arith.constant dense<0.000000e+00> : vector<8x128xf32>
    %34 = tpu.matmul %31, %33, %cst_24 {dimension_numbers = #tpu.dot_dimension_numbers<[1], [0], [0], [1], [0, 0, 1, 1], [], []>} : vector<8x128xbf16>, vector<128x128xbf16>, vector<8x128xf32> -> vector<8x128xf32>
    %c3_25 = arith.constant 3 : index
    %c0_26 = arith.constant 0 : index
    %c0_27 = arith.constant 0 : index
    %35 = vector.load %arg3[%c3_25, %c0_26, %c0_27] : memref<9x1x128xf32, #tpu.memory_space<vmem>>, vector<1x1x128xf32>
    %36 = vector.shape_cast %35 : vector<1x1x128xf32> to vector<1x128xf32>
    %37 = vector.broadcast %36 : vector<1x128xf32> to vector<8x128xf32>
    %38 = arith.addf %34, %37 : vector<8x128xf32>
    %cst_28 = arith.constant 0.000000e+00 : f32
    %39 = vector.broadcast %cst_28 : f32 to vector<8x128xf32>
    %40 = arith.maximumf %38, %39 : vector<8x128xf32>
    %41 = arith.truncf %40 : vector<8x128xf32> to vector<8x128xbf16>
    %c4 = arith.constant 4 : index
    %c0_29 = arith.constant 0 : index
    %c0_30 = arith.constant 0 : index
    %42 = vector.load %arg2[%c4, %c0_29, %c0_30] : memref<9x128x128xbf16, #tpu.memory_space<vmem>>, vector<1x128x128xbf16>
    %43 = vector.shape_cast %42 : vector<1x128x128xbf16> to vector<128x128xbf16>
    %cst_31 = arith.constant dense<0.000000e+00> : vector<8x128xf32>
    %44 = tpu.matmul %41, %43, %cst_31 {dimension_numbers = #tpu.dot_dimension_numbers<[1], [0], [0], [1], [0, 0, 1, 1], [], []>} : vector<8x128xbf16>, vector<128x128xbf16>, vector<8x128xf32> -> vector<8x128xf32>
    %c4_32 = arith.constant 4 : index
    %c0_33 = arith.constant 0 : index
    %c0_34 = arith.constant 0 : index
    %45 = vector.load %arg3[%c4_32, %c0_33, %c0_34] : memref<9x1x128xf32, #tpu.memory_space<vmem>>, vector<1x1x128xf32>
    %46 = vector.shape_cast %45 : vector<1x1x128xf32> to vector<1x128xf32>
    %47 = vector.broadcast %46 : vector<1x128xf32> to vector<8x128xf32>
    %48 = arith.addf %44, %47 : vector<8x128xf32>
    %cst_35 = arith.constant 0.000000e+00 : f32
    %49 = vector.broadcast %cst_35 : f32 to vector<8x128xf32>
    %50 = arith.maximumf %48, %49 : vector<8x128xf32>
    %51 = arith.truncf %50 : vector<8x128xf32> to vector<8x128xbf16>
    %c5 = arith.constant 5 : index
    %c0_36 = arith.constant 0 : index
    %c0_37 = arith.constant 0 : index
    %52 = vector.load %arg2[%c5, %c0_36, %c0_37] : memref<9x128x128xbf16, #tpu.memory_space<vmem>>, vector<1x128x128xbf16>
    %53 = vector.shape_cast %52 : vector<1x128x128xbf16> to vector<128x128xbf16>
    %cst_38 = arith.constant dense<0.000000e+00> : vector<8x128xf32>
    %54 = tpu.matmul %51, %53, %cst_38 {dimension_numbers = #tpu.dot_dimension_numbers<[1], [0], [0], [1], [0, 0, 1, 1], [], []>} : vector<8x128xbf16>, vector<128x128xbf16>, vector<8x128xf32> -> vector<8x128xf32>
    %c5_39 = arith.constant 5 : index
    %c0_40 = arith.constant 0 : index
    %c0_41 = arith.constant 0 : index
    %55 = vector.load %arg3[%c5_39, %c0_40, %c0_41] : memref<9x1x128xf32, #tpu.memory_space<vmem>>, vector<1x1x128xf32>
    %56 = vector.shape_cast %55 : vector<1x1x128xf32> to vector<1x128xf32>
    %57 = vector.broadcast %56 : vector<1x128xf32> to vector<8x128xf32>
    %58 = arith.addf %54, %57 : vector<8x128xf32>
    %cst_42 = arith.constant 0.000000e+00 : f32
    %59 = vector.broadcast %cst_42 : f32 to vector<8x128xf32>
    %60 = arith.maximumf %58, %59 : vector<8x128xf32>
    %61 = arith.truncf %60 : vector<8x128xf32> to vector<8x128xbf16>
    %c6 = arith.constant 6 : index
    %c0_43 = arith.constant 0 : index
    %c0_44 = arith.constant 0 : index
    %62 = vector.load %arg2[%c6, %c0_43, %c0_44] : memref<9x128x128xbf16, #tpu.memory_space<vmem>>, vector<1x128x128xbf16>
    %63 = vector.shape_cast %62 : vector<1x128x128xbf16> to vector<128x128xbf16>
    %cst_45 = arith.constant dense<0.000000e+00> : vector<8x128xf32>
    %64 = tpu.matmul %61, %63, %cst_45 {dimension_numbers = #tpu.dot_dimension_numbers<[1], [0], [0], [1], [0, 0, 1, 1], [], []>} : vector<8x128xbf16>, vector<128x128xbf16>, vector<8x128xf32> -> vector<8x128xf32>
    %c6_46 = arith.constant 6 : index
    %c0_47 = arith.constant 0 : index
    %c0_48 = arith.constant 0 : index
    %65 = vector.load %arg3[%c6_46, %c0_47, %c0_48] : memref<9x1x128xf32, #tpu.memory_space<vmem>>, vector<1x1x128xf32>
    %66 = vector.shape_cast %65 : vector<1x1x128xf32> to vector<1x128xf32>
    %67 = vector.broadcast %66 : vector<1x128xf32> to vector<8x128xf32>
    %68 = arith.addf %64, %67 : vector<8x128xf32>
    %cst_49 = arith.constant 0.000000e+00 : f32
    %69 = vector.broadcast %cst_49 : f32 to vector<8x128xf32>
    %70 = arith.maximumf %68, %69 : vector<8x128xf32>
    %71 = arith.truncf %70 : vector<8x128xf32> to vector<8x128xbf16>
    %c7 = arith.constant 7 : index
    %c0_50 = arith.constant 0 : index
    %c0_51 = arith.constant 0 : index
    %72 = vector.load %arg2[%c7, %c0_50, %c0_51] : memref<9x128x128xbf16, #tpu.memory_space<vmem>>, vector<1x128x128xbf16>
    %73 = vector.shape_cast %72 : vector<1x128x128xbf16> to vector<128x128xbf16>
    %cst_52 = arith.constant dense<0.000000e+00> : vector<8x128xf32>
    %74 = tpu.matmul %71, %73, %cst_52 {dimension_numbers = #tpu.dot_dimension_numbers<[1], [0], [0], [1], [0, 0, 1, 1], [], []>} : vector<8x128xbf16>, vector<128x128xbf16>, vector<8x128xf32> -> vector<8x128xf32>
    %c7_53 = arith.constant 7 : index
    %c0_54 = arith.constant 0 : index
    %c0_55 = arith.constant 0 : index
    %75 = vector.load %arg3[%c7_53, %c0_54, %c0_55] : memref<9x1x128xf32, #tpu.memory_space<vmem>>, vector<1x1x128xf32>
    %76 = vector.shape_cast %75 : vector<1x1x128xf32> to vector<1x128xf32>
    %77 = vector.broadcast %76 : vector<1x128xf32> to vector<8x128xf32>
    %78 = arith.addf %74, %77 : vector<8x128xf32>
    %cst_56 = arith.constant 0.000000e+00 : f32
    %79 = vector.broadcast %cst_56 : f32 to vector<8x128xf32>
    %80 = arith.maximumf %78, %79 : vector<8x128xf32>
    %81 = arith.truncf %80 : vector<8x128xf32> to vector<8x128xbf16>
    %c8 = arith.constant 8 : index
    %c0_57 = arith.constant 0 : index
    %c0_58 = arith.constant 0 : index
    %82 = vector.load %arg2[%c8, %c0_57, %c0_58] : memref<9x128x128xbf16, #tpu.memory_space<vmem>>, vector<1x128x128xbf16>
    %83 = vector.shape_cast %82 : vector<1x128x128xbf16> to vector<128x128xbf16>
    %cst_59 = arith.constant dense<0.000000e+00> : vector<8x128xf32>
    %84 = tpu.matmul %81, %83, %cst_59 {dimension_numbers = #tpu.dot_dimension_numbers<[1], [0], [0], [1], [0, 0, 1, 1], [], []>} : vector<8x128xbf16>, vector<128x128xbf16>, vector<8x128xf32> -> vector<8x128xf32>
    %c8_60 = arith.constant 8 : index
    %c0_61 = arith.constant 0 : index
    %c0_62 = arith.constant 0 : index
    %85 = vector.load %arg3[%c8_60, %c0_61, %c0_62] : memref<9x1x128xf32, #tpu.memory_space<vmem>>, vector<1x1x128xf32>
    %86 = vector.shape_cast %85 : vector<1x1x128xf32> to vector<1x128xf32>
    %87 = vector.broadcast %86 : vector<1x128xf32> to vector<8x128xf32>
    %88 = arith.addf %84, %87 : vector<8x128xf32>
    %c0_63 = arith.constant 0 : index
    %c0_64 = arith.constant 0 : index
    %89 = vector.load %arg4[%c0_63, %c0_64] : memref<8x128xf32, #tpu.memory_space<vmem>>, vector<8x128xf32>
    tpu.vector_store %arg4[%c0_63, %c0_64], %88 {strides = array<i32>} : memref<8x128xf32, #tpu.memory_space<vmem>>, vector<8x128xf32>,
    return
  }
  func.func @transform_0(%arg0: i32) -> (i32, i32) {
    %c0_i32 = arith.constant 0 : i32
    %c0_i32_0 = arith.constant 0 : i32
    return %arg0, %c0_i32 : i32, i32
  }
  func.func @transform_1(%arg0: i32) -> (i32, i32, i32) {
    %c0_i32 = arith.constant 0 : i32
    %c0_i32_0 = arith.constant 0 : i32
    %c0_i32_1 = arith.constant 0 : i32
    %c0_i32_2 = arith.constant 0 : i32
    return %c0_i32, %c0_i32_0, %c0_i32_1 : i32, i32, i32
  }
  func.func @transform_2(%arg0: i32) -> (i32, i32, i32) {
    %c0_i32 = arith.constant 0 : i32
    %c0_i32_0 = arith.constant 0 : i32
    %c0_i32_1 = arith.constant 0 : i32
    %c0_i32_2 = arith.constant 0 : i32
    return %c0_i32, %c0_i32_0, %c0_i32_1 : i32, i32, i32
  }
  func.func @transform_3(%arg0: i32) -> (i32, i32) {
    %c0_i32 = arith.constant 0 : i32
    %c0_i32_0 = arith.constant 0 : i32
    return %arg0, %c0_i32 : i32, i32
  }
}

</mosaic_0001>

<llo_original>
// kernel: tpu_custom_call.1
$region0: #{tpu_custom_call.1}
  #allocation0 [shape = 'u32[]', space=smem, size = 0x4, offset = 0x4, fixed_abs, tag = 'smem constant byte address 0x4 - core index']
  #allocation1 [shape = 'u32[72,128]{1,0:T(1,128)}', space=vmem, size = 0x9000, scoped, tag = 'internal scratch']
  %s0 = inlined_call_operand.hbm [shape: f32[8,128], index: 0, kind: input, shape index: {}]
  %s1 = inlined_call_operand.hbm [shape: bf16[9,128,128], index: 1, kind: input, shape index: {}]
  %s2 = inlined_call_operand.hbm [shape: f32[9,1,128], index: 2, kind: input, shape index: {}]
  %s3 = inlined_call_operand.hbm [shape: f32[8,128], index: 3, kind: output, shape index: {}]
  %s4 = sld [smem:[#allocation0]]
  $region34: #{tpu_custom_call.1} parent=0
    _
  %s6 = ssub.s32 1, %s4
  %s7 = scalar_select 0, %s6, %s4
  $region1: #{tpu_custom_call.1} parent=0
    #allocation2 [shape = 'u8[4096]{0}', space=vmem, size = 0x1000, scoped, tag = 'input window, operand 0, single buffered']
    #allocation3 [shape = 's32[1]{0}', space=sflag, size = 0x4, scoped, tag = 'scoped memory for tpu_custom_call.1']
    #allocation4 [shape = 's32[1]{0}', space=sflag, size = 0x4, scoped, tag = 'scoped memory for tpu_custom_call.1']
    #allocation5 [shape = 'u8[294912]{0}', space=vmem, size = 0x48000, scoped, tag = 'input window, operand 1, single buffered']
    #allocation6 [shape = 's32[1]{0}', space=sflag, size = 0x4, scoped, tag = 'scoped memory for tpu_custom_call.1']
    #allocation7 [shape = 'u8[4608]{0}', space=vmem, size = 0x1400, scoped, tag = 'input window, operand 2, single buffered']
    #allocation8 [shape = 'u8[4096]{0}', space=vmem, size = 0x1000, scoped, tag = 'output window, operand 0, single buffered']
    %8 = vsyncpa [#allocation3], 0
    %9 = vsyncpa [#allocation6], 0
    %10 = vsyncpa [#allocation4], 0
    // Predicated region
    $region2: #{tpu_custom_call.1} parent=1 // pred_check
      _
    $region3: #{tpu_custom_call.1} parent=1 // pred_check_branch
      %12 = sbr.rel (0) target = $region5
    $region4: #{tpu_custom_call.1} parent=1 // pred_region
      %14 = vsyncadd [#allocation3], 0
      %s16 = sshll.u32 %s0, 4
      %s17 = int_to_ptr.hbm [resolvable:$true] %s16
      %s18 = sshll.u32 [#allocation2], 4
      %s19 = int_to_ptr.vmem [resolvable:$true] %s18
      %21 = dma.hbm_to_vmem [thread:$0]  %s17, 128, %s19, [#allocation3]
    $region5: #{tpu_custom_call.1} parent=1 // pred_fallthru
      _
    // Predicated region
    $region6: #{tpu_custom_call.1} parent=1 // pred_check
      _
    $region7: #{tpu_custom_call.1} parent=1 // pred_check_branch
      %23 = sbr.rel (0) target = $region9
    $region8: #{tpu_custom_call.1} parent=1 // pred_region
      %25 = vsyncadd [#allocation6], 0
      %s26 = sshll.u32 %s1, 4
      %s27 = int_to_ptr.hbm [resolvable:$true] %s26
      %s28 = sshll.u32 [#allocation5], 4
      %s29 = int_to_ptr.vmem [resolvable:$true] %s28
      %34 = dma.hbm_to_vmem [thread:$0]  %s27, 9216, %s29, [#allocation6], 64, 64, 4
    $region9: #{tpu_custom_call.1} parent=1 // pred_fallthru
      _
    // Predicated region
    $region10: #{tpu_custom_call.1} parent=1 // pred_check
      _
    $region11: #{tpu_custom_call.1} parent=1 // pred_check_branch
      %36 = sbr.rel (0) target = $region13
    $region12: #{tpu_custom_call.1} parent=1 // pred_region
      %38 = vsyncadd [#allocation6], 0
      %s39 = sshll.u32 %s2, 4
      %s40 = int_to_ptr.hbm [resolvable:$true] %s39
      %s41 = sshll.u32 [#allocation7], 4
      %s42 = int_to_ptr.vmem [resolvable:$true] %s41
      %47 = dma.hbm_to_vmem [thread:$0]  %s40, 144, %s42, [#allocation6], 16, 16, 1
    $region13: #{tpu_custom_call.1} parent=1 // pred_fallthru
      _
    // Predicated region
    $region14: #{tpu_custom_call.1} parent=1 // pred_check
      _
    $region15: #{tpu_custom_call.1} parent=1 // pred_check_branch
      %49 = sbr.rel (0) target = $region17
    $region16: #{tpu_custom_call.1} parent=1 // pred_region
      %51 = dma.done [#allocation3], 128
    $region17: #{tpu_custom_call.1} parent=1 // pred_fallthru
      _
    // Predicated region
    $region18: #{tpu_custom_call.1} parent=1 // pred_check
      _
    $region19: #{tpu_custom_call.1} parent=1 // pred_check_branch
      %53 = sbr.rel (0) target = $region21
    $region20: #{tpu_custom_call.1} parent=1 // pred_region
      %55 = dma.done [#allocation6], 9216
    $region21: #{tpu_custom_call.1} parent=1 // pred_fallthru
      _
    // Predicated region
    $region22: #{tpu_custom_call.1} parent=1 // pred_check
      _
    $region23: #{tpu_custom_call.1} parent=1 // pred_check_branch
      %57 = sbr.rel (0) target = $region25
    $region24: #{tpu_custom_call.1} parent=1 // pred_region
      %59 = dma.done [#allocation6], 144
    $region25: #{tpu_custom_call.1} parent=1 // pred_fallthru
      _
    %v60 = vld [vmem:[#allocation2] sm:$0xff]
    %v61 = vpack.c.bf16 %v60, %v60
    %v62 = vld [vmem:[#allocation5] sm:$0xf]
    %v63 = vld [vmem:[#allocation5 + $0x4] sm:$0xf]
    %v64 = vld [vmem:[#allocation5 + $0x8] sm:$0xf]
    %v65 = vld [vmem:[#allocation5 + $0xc] sm:$0xf]
    %v66 = vld [vmem:[#allocation5 + $0x10] sm:$0xf]
    %v67 = vld [vmem:[#allocation5 + $0x14] sm:$0xf]
    %v68 = vld [vmem:[#allocation5 + $0x18] sm:$0xf]
    %v69 = vld [vmem:[#allocation5 + $0x1c] sm:$0xf]
    %v70 = vld [vmem:[#allocation5 + $0x20] sm:$0xf]
    %v71 = vld [vmem:[#allocation5 + $0x24] sm:$0xf]
    %v72 = vld [vmem:[#allocation5 + $0x28] sm:$0xf]
    %v73 = vld [vmem:[#allocation5 + $0x2c] sm:$0xf]
    %v74 = vld [vmem:[#allocation5 + $0x30] sm:$0xf]
    %v75 = vld [vmem:[#allocation5 + $0x34] sm:$0xf]
    %v76 = vld [vmem:[#allocation5 + $0x38] sm:$0xf]
    %v77 = vld [vmem:[#allocation5 + $0x3c] sm:$0xf]
    %v78 = vld [vmem:[#allocation7] sm:$0x1]
    %v80 = vperm.slane %v78, 0
    %v98 = vunpack.c.l.b16 %v62
    %v99 = vunpack.c.l.b16 %v63
    %v100 = vunpack.c.l.b16 %v64
    %v101 = vunpack.c.l.b16 %v65
    %v102 = vunpack.c.l.b16 %v66
    %v103 = vunpack.c.l.b16 %v67
    %v104 = vunpack.c.l.b16 %v68
    %v105 = vunpack.c.l.b16 %v69
    %v106 = vunpack.c.l.b16 %v70
    %v107 = vunpack.c.l.b16 %v71
    %v108 = vunpack.c.l.b16 %v72
    %v109 = vunpack.c.l.b16 %v73
    %v110 = vunpack.c.l.b16 %v74
    %v111 = vunpack.c.l.b16 %v75
    %v112 = vunpack.c.l.b16 %v76
    %v113 = vunpack.c.l.b16 %v77
    %v114 = vpack.c.b16 %v99, %v98
    %v115 = vpack.c.b16 %v101, %v100
    %v116 = vpack.c.b16 %v103, %v102
    %v117 = vpack.c.b16 %v105, %v104
    %v118 = vpack.c.b16 %v107, %v106
    %v119 = vpack.c.b16 %v109, %v108
    %v120 = vpack.c.b16 %v111, %v110
    %v121 = vpack.c.b16 %v113, %v112
    %130 = vmatpush.bf16.msra.mxu0 %v121
    %131 = vmatpush.bf16.msra.mxu0 %v120
    %132 = vmatpush.bf16.msra.mxu0 %v119
    %133 = vmatpush.bf16.msra.mxu0 %v118
    %134 = vmatpush.bf16.msra.mxu0 %v117
    %135 = vmatpush.bf16.msra.mxu0 %v116
    %136 = vmatpush.bf16.msra.mxu0 %v115
    %137 = vmatpush.bf16.msra.mxu0 %v114
    %138 = vmatmul.bf16.gmra.mxu0 %v61
    %v139 = vpop.f32.mrf.mxu0
    %v140 = vadd.f32 %v80, %v139
    %v141 = vpop.f32.mrf.mxu0
    %142 = vdwg.mxu0
    %v143 = vmax.f32 %v140, 0.0
    %v144 = vpack.c.bf16 %v143, %v143
    %s145 = scalar_lea.vmem [#allocation5], 64
    %v146 = vld [vmem:[%s145] sm:$0xf]
    %v147 = vld [vmem:[%s145 + $0x4] sm:$0xf]
    %v148 = vld [vmem:[%s145 + $0x8] sm:$0xf]
    %v149 = vld [vmem:[%s145 + $0xc] sm:$0xf]
    %v150 = vld [vmem:[%s145 + $0x10] sm:$0xf]
    %v151 = vld [vmem:[%s145 + $0x14] sm:$0xf]
    %v152 = vld [vmem:[%s145 + $0x18] sm:$0xf]
    %v153 = vld [vmem:[%s145 + $0x1c] sm:$0xf]
    %v154 = vld [vmem:[%s145 + $0x20] sm:$0xf]
    %v155 = vld [vmem:[%s145 + $0x24] sm:$0xf]
    %v156 = vld [vmem:[%s145 + $0x28] sm:$0xf]
    %v157 = vld [vmem:[%s145 + $0x2c] sm:$0xf]
    %v158 = vld [vmem:[%s145 + $0x30] sm:$0xf]
    %v159 = vld [vmem:[%s145 + $0x34] sm:$0xf]
    %v160 = vld [vmem:[%s145 + $0x38] sm:$0xf]
    %v161 = vld [vmem:[%s145 + $0x3c] sm:$0xf]
    %s162 = scalar_lea.vmem [#allocation7], 1
    %v163 = vld [vmem:[%s162] sm:$0x1]
    %v165 = vperm.slane %v163, 0
    %v183 = vunpack.c.l.b16 %v146
    %v184 = vunpack.c.l.b16 %v147
    %v185 = vunpack.c.l.b16 %v148
    %v186 = vunpack.c.l.b16 %v149
    %v187 = vunpack.c.l.b16 %v150
    %v188 = vunpack.c.l.b16 %v151
    %v189 = vunpack.c.l.b16 %v152
    %v190 = vunpack.c.l.b16 %v153
    %v191 = vunpack.c.l.b16 %v154
    %v192 = vunpack.c.l.b16 %v155
    %v193 = vunpack.c.l.b16 %v156
    %v194 = vunpack.c.l.b16 %v157
    %v195 = vunpack.c.l.b16 %v158
    %v196 = vunpack.c.l.b16 %v159
    %v197 = vunpack.c.l.b16 %v160
    %v198 = vunpack.c.l.b16 %v161
    %v199 = vpack.c.b16 %v184, %v183
    %v200 = vpack.c.b16 %v186, %v185
    %v201 = vpack.c.b16 %v188, %v187
    %v202 = vpack.c.b16 %v190, %v189
    %v203 = vpack.c.b16 %v192, %v191
    %v204 = vpack.c.b16 %v194, %v193
    %v205 = vpack.c.b16 %v196, %v195
    %v206 = vpack.c.b16 %v198, %v197
    %215 = vmatpush.bf16.msra.mxu0 %v206
    %216 = vmatpush.bf16.msra.mxu0 %v205
    %217 = vmatpush.bf16.msra.mxu0 %v204
    %218 = vmatpush.bf16.msra.mxu0 %v203
    %219 = vmatpush.bf16.msra.mxu0 %v202
    %220 = vmatpush.bf16.msra.mxu0 %v201
    %221 = vmatpush.bf16.msra.mxu0 %v200
    %222 = vmatpush.bf16.msra.mxu0 %v199
    %223 = vmatmul.bf16.gmra.mxu0 %v144
    %v224 = vpop.f32.mrf.mxu0
    %v225 = vadd.f32 %v165, %v224
    %v226 = vpop.f32.mrf.mxu0
    %227 = vdwg.mxu0
    %v228 = vmax.f32 %v225, 0.0
    %v229 = vpack.c.bf16 %v228, %v228
    %s230 = scalar_lea.vmem [#allocation5], 128
    %v231 = vld [vmem:[%s230] sm:$0xf]
    %v232 = vld [vmem:[%s230 + $0x4] sm:$0xf]
    %v233 = vld [vmem:[%s230 + $0x8] sm:$0xf]
    %v234 = vld [vmem:[%s230 + $0xc] sm:$0xf]
    %v235 = vld [vmem:[%s230 + $0x10] sm:$0xf]
    %v236 = vld [vmem:[%s230 + $0x14] sm:$0xf]
    %v237 = vld [vmem:[%s230 + $0x18] sm:$0xf]
    %v238 = vld [vmem:[%s230 + $0x1c] sm:$0xf]
    %v239 = vld [vmem:[%s230 + $0x20] sm:$0xf]
    %v240 = vld [vmem:[%s230 + $0x24] sm:$0xf]
    %v241 = vld [vmem:[%s230 + $0x28] sm:$0xf]
    %v242 = vld [vmem:[%s230 + $0x2c] sm:$0xf]
    %v243 = vld [vmem:[%s230 + $0x30] sm:$0xf]
    %v244 = vld [vmem:[%s230 + $0x34] sm:$0xf]
    %v245 = vld [vmem:[%s230 + $0x38] sm:$0xf]
    %v246 = vld [vmem:[%s230 + $0x3c] sm:$0xf]
    %s247 = scalar_lea.vmem [#allocation7], 2
    %v248 = vld [vmem:[%s247] sm:$0x1]
    %v250 = vperm.slane %v248, 0
    %v268 = vunpack.c.l.b16 %v231
    %v269 = vunpack.c.l.b16 %v232
    %v270 = vunpack.c.l.b16 %v233
    %v271 = vunpack.c.l.b16 %v234
    %v272 = vunpack.c.l.b16 %v235
    %v273 = vunpack.c.l.b16 %v236
    %v274 = vunpack.c.l.b16 %v237
    %v275 = vunpack.c.l.b16 %v238
    %v276 = vunpack.c.l.b16 %v239
    %v277 = vunpack.c.l.b16 %v240
    %v278 = vunpack.c.l.b16 %v241
    %v279 = vunpack.c.l.b16 %v242
    %v280 = vunpack.c.l.b16 %v243
    %v281 = vunpack.c.l.b16 %v244
    %v282 = vunpack.c.l.b16 %v245
    %v283 = vunpack.c.l.b16 %v246
    %v284 = vpack.c.b16 %v269, %v268
    %v285 = vpack.c.b16 %v271, %v270
    %v286 = vpack.c.b16 %v273, %v272
    %v287 = vpack.c.b16 %v275, %v274
    %v288 = vpack.c.b16 %v277, %v276
    %v289 = vpack.c.b16 %v279, %v278
    %v290 = vpack.c.b16 %v281, %v280
    %v291 = vpack.c.b16 %v283, %v282
    %300 = vmatpush.bf16.msra.mxu0 %v291
    %301 = vmatpush.bf16.msra.mxu0 %v290
    %302 = vmatpush.bf16.msra.mxu0 %v289
    %303 = vmatpush.bf16.msra.mxu0 %v288
    %304 = vmatpush.bf16.msra.mxu0 %v287
    %305 = vmatpush.bf16.msra.mxu0 %v286
    %306 = vmatpush.bf16.msra.mxu0 %v285
    %307 = vmatpush.bf16.msra.mxu0 %v284
    %308 = vmatmul.bf16.gmra.mxu0 %v229
    %v309 = vpop.f32.mrf.mxu0
    %v310 = vadd.f32 %v250, %v309
    %v311 = vpop.f32.mrf.mxu0
    %312 = vdwg.mxu0
    %v313 = vmax.f32 %v310, 0.0
    %v314 = vpack.c.bf16 %v313, %v313
    %s315 = scalar_lea.vmem [#allocation5], 192
    %v316 = vld [vmem:[%s315] sm:$0xf]
    %v317 = vld [vmem:[%s315 + $0x4] sm:$0xf]
    %v318 = vld [vmem:[%s315 + $0x8] sm:$0xf]
    %v319 = vld [vmem:[%s315 + $0xc] sm:$0xf]
    %v320 = vld [vmem:[%s315 + $0x10] sm:$0xf]
    %v321 = vld [vmem:[%s315 + $0x14] sm:$0xf]
    %v322 = vld [vmem:[%s315 + $0x18] sm:$0xf]
    %v323 = vld [vmem:[%s315 + $0x1c] sm:$0xf]
    %v324 = vld [vmem:[%s315 + $0x20] sm:$0xf]
    %v325 = vld [vmem:[%s315 + $0x24] sm:$0xf]
    %v326 = vld [vmem:[%s315 + $0x28] sm:$0xf]
    %v327 = vld [vmem:[%s315 + $0x2c] sm:$0xf]
    %v328 = vld [vmem:[%s315 + $0x30] sm:$0xf]
    %v329 = vld [vmem:[%s315 + $0x34] sm:$0xf]
    %v330 = vld [vmem:[%s315 + $0x38] sm:$0xf]
    %v331 = vld [vmem:[%s315 + $0x3c] sm:$0xf]
    %s332 = scalar_lea.vmem [#allocation7], 3
    %v333 = vld [vmem:[%s332] sm:$0x1]
    %v335 = vperm.slane %v333, 0
    %v353 = vunpack.c.l.b16 %v316
    %v354 = vunpack.c.l.b16 %v317
    %v355 = vunpack.c.l.b16 %v318
    %v356 = vunpack.c.l.b16 %v319
    %v357 = vunpack.c.l.b16 %v320
    %v358 = vunpack.c.l.b16 %v321
    %v359 = vunpack.c.l.b16 %v322
    %v360 = vunpack.c.l.b16 %v323
    %v361 = vunpack.c.l.b16 %v324
    %v362 = vunpack.c.l.b16 %v325
    %v363 = vunpack.c.l.b16 %v326
    %v364 = vunpack.c.l.b16 %v327
    %v365 = vunpack.c.l.b16 %v328
    %v366 = vunpack.c.l.b16 %v329
    %v367 = vunpack.c.l.b16 %v330
    %v368 = vunpack.c.l.b16 %v331
    %v369 = vpack.c.b16 %v354, %v353
    %v370 = vpack.c.b16 %v356, %v355
    %v371 = vpack.c.b16 %v358, %v357
    %v372 = vpack.c.b16 %v360, %v359
    %v373 = vpack.c.b16 %v362, %v361
    %v374 = vpack.c.b16 %v364, %v363
    %v375 = vpack.c.b16 %v366, %v365
    %v376 = vpack.c.b16 %v368, %v367
    %385 = vmatpush.bf16.msra.mxu0 %v376
    %386 = vmatpush.bf16.msra.mxu0 %v375
    %387 = vmatpush.bf16.msra.mxu0 %v374
    %388 = vmatpush.bf16.msra.mxu0 %v373
    %389 = vmatpush.bf16.msra.mxu0 %v372
    %390 = vmatpush.bf16.msra.mxu0 %v371
    %391 = vmatpush.bf16.msra.mxu0 %v370
    %392 = vmatpush.bf16.msra.mxu0 %v369
    %393 = vmatmul.bf16.gmra.mxu0 %v314
    %v394 = vpop.f32.mrf.mxu0
    %v395 = vadd.f32 %v335, %v394
    %v396 = vpop.f32.mrf.mxu0
    %397 = vdwg.mxu0
    %v398 = vmax.f32 %v395, 0.0
    %v399 = vpack.c.bf16 %v398, %v398
    %s400 = scalar_lea.vmem [#allocation5], 256
    %v401 = vld [vmem:[%s400] sm:$0xf]
    %v402 = vld [vmem:[%s400 + $0x4] sm:$0xf]
    %v403 = vld [vmem:[%s400 + $0x8] sm:$0xf]
    %v404 = vld [vmem:[%s400 + $0xc] sm:$0xf]
    %v405 = vld [vmem:[%s400 + $0x10] sm:$0xf]
    %v406 = vld [vmem:[%s400 + $0x14] sm:$0xf]
    %v407 = vld [vmem:[%s400 + $0x18] sm:$0xf]
    %v408 = vld [vmem:[%s400 + $0x1c] sm:$0xf]
    %v409 = vld [vmem:[%s400 + $0x20] sm:$0xf]
    %v410 = vld [vmem:[%s400 + $0x24] sm:$0xf]
    %v411 = vld [vmem:[%s400 + $0x28] sm:$0xf]
    %v412 = vld [vmem:[%s400 + $0x2c] sm:$0xf]
    %v413 = vld [vmem:[%s400 + $0x30] sm:$0xf]
    %v414 = vld [vmem:[%s400 + $0x34] sm:$0xf]
    %v415 = vld [vmem:[%s400 + $0x38] sm:$0xf]
    %v416 = vld [vmem:[%s400 + $0x3c] sm:$0xf]
    %s417 = scalar_lea.vmem [#allocation7], 4
    %v418 = vld [vmem:[%s417] sm:$0x1]
    %v420 = vperm.slane %v418, 0
    %v438 = vunpack.c.l.b16 %v401
    %v439 = vunpack.c.l.b16 %v402
    %v440 = vunpack.c.l.b16 %v403
    %v441 = vunpack.c.l.b16 %v404
    %v442 = vunpack.c.l.b16 %v405
    %v443 = vunpack.c.l.b16 %v406
    %v444 = vunpack.c.l.b16 %v407
    %v445 = vunpack.c.l.b16 %v408
    %v446 = vunpack.c.l.b16 %v409
    %v447 = vunpack.c.l.b16 %v410
    %v448 = vunpack.c.l.b16 %v411
    %v449 = vunpack.c.l.b16 %v412
    %v450 = vunpack.c.l.b16 %v413
    %v451 = vunpack.c.l.b16 %v414
    %v452 = vunpack.c.l.b16 %v415
    %v453 = vunpack.c.l.b16 %v416
    %v454 = vpack.c.b16 %v439, %v438
    %v455 = vpack.c.b16 %v441, %v440
    %v456 = vpack.c.b16 %v443, %v442
    %v457 = vpack.c.b16 %v445, %v444
    %v458 = vpack.c.b16 %v447, %v446
    %v459 = vpack.c.b16 %v449, %v448
    %v460 = vpack.c.b16 %v451, %v450
    %v461 = vpack.c.b16 %v453, %v452
    %470 = vmatpush.bf16.msra.mxu0 %v461
    %471 = vmatpush.bf16.msra.mxu0 %v460
    %472 = vmatpush.bf16.msra.mxu0 %v459
    %473 = vmatpush.bf16.msra.mxu0 %v458
    %474 = vmatpush.bf16.msra.mxu0 %v457
    %475 = vmatpush.bf16.msra.mxu0 %v456
    %476 = vmatpush.bf16.msra.mxu0 %v455
    %477 = vmatpush.bf16.msra.mxu0 %v454
    %478 = vmatmul.bf16.gmra.mxu0 %v399
    %v479 = vpop.f32.mrf.mxu0
    %v480 = vadd.f32 %v420, %v479
    %v481 = vpop.f32.mrf.mxu0
    %482 = vdwg.mxu0
    %v483 = vmax.f32 %v480, 0.0
    %v484 = vpack.c.bf16 %v483, %v483
    %s485 = scalar_lea.vmem [#allocation5], 320
    %v486 = vld [vmem:[%s485] sm:$0xf]
    %v487 = vld [vmem:[%s485 + $0x4] sm:$0xf]
    %v488 = vld [vmem:[%s485 + $0x8] sm:$0xf]
    %v489 = vld [vmem:[%s485 + $0xc] sm:$0xf]
    %v490 = vld [vmem:[%s485 + $0x10] sm:$0xf]
    %v491 = vld [vmem:[%s485 + $0x14] sm:$0xf]
    %v492 = vld [vmem:[%s485 + $0x18] sm:$0xf]
    %v493 = vld [vmem:[%s485 + $0x1c] sm:$0xf]
    %v494 = vld [vmem:[%s485 + $0x20] sm:$0xf]
    %v495 = vld [vmem:[%s485 + $0x24] sm:$0xf]
    %v496 = vld [vmem:[%s485 + $0x28] sm:$0xf]
    %v497 = vld [vmem:[%s485 + $0x2c] sm:$0xf]
    %v498 = vld [vmem:[%s485 + $0x30] sm:$0xf]
    %v499 = vld [vmem:[%s485 + $0x34] sm:$0xf]
    %v500 = vld [vmem:[%s485 + $0x38] sm:$0xf]
    %v501 = vld [vmem:[%s485 + $0x3c] sm:$0xf]
    %s502 = scalar_lea.vmem [#allocation7], 5
    %v503 = vld [vmem:[%s502] sm:$0x1]
    %v505 = vperm.slane %v503, 0
    %v523 = vunpack.c.l.b16 %v486
    %v524 = vunpack.c.l.b16 %v487
    %v525 = vunpack.c.l.b16 %v488
    %v526 = vunpack.c.l.b16 %v489
    %v527 = vunpack.c.l.b16 %v490
    %v528 = vunpack.c.l.b16 %v491
    %v529 = vunpack.c.l.b16 %v492
    %v530 = vunpack.c.l.b16 %v493
    %v531 = vunpack.c.l.b16 %v494
    %v532 = vunpack.c.l.b16 %v495
    %v533 = vunpack.c.l.b16 %v496
    %v534 = vunpack.c.l.b16 %v497
    %v535 = vunpack.c.l.b16 %v498
    %v536 = vunpack.c.l.b16 %v499
    %v537 = vunpack.c.l.b16 %v500
    %v538 = vunpack.c.l.b16 %v501
    %v539 = vpack.c.b16 %v524, %v523
    %v540 = vpack.c.b16 %v526, %v525
    %v541 = vpack.c.b16 %v528, %v527
    %v542 = vpack.c.b16 %v530, %v529
    %v543 = vpack.c.b16 %v532, %v531
    %v544 = vpack.c.b16 %v534, %v533
    %v545 = vpack.c.b16 %v536, %v535
    %v546 = vpack.c.b16 %v538, %v537
    %555 = vmatpush.bf16.msra.mxu0 %v546
    %556 = vmatpush.bf16.msra.mxu0 %v545
    %557 = vmatpush.bf16.msra.mxu0 %v544
    %558 = vmatpush.bf16.msra.mxu0 %v543
    %559 = vmatpush.bf16.msra.mxu0 %v542
    %560 = vmatpush.bf16.msra.mxu0 %v541
    %561 = vmatpush.bf16.msra.mxu0 %v540
    %562 = vmatpush.bf16.msra.mxu0 %v539
    %563 = vmatmul.bf16.gmra.mxu0 %v484
    %v564 = vpop.f32.mrf.mxu0
    %v565 = vadd.f32 %v505, %v564
    %v566 = vpop.f32.mrf.mxu0
    %567 = vdwg.mxu0
    %v568 = vmax.f32 %v565, 0.0
    %v569 = vpack.c.bf16 %v568, %v568
    %s570 = scalar_lea.vmem [#allocation5], 384
    %v571 = vld [vmem:[%s570] sm:$0xf]
    %v572 = vld [vmem:[%s570 + $0x4] sm:$0xf]
    %v573 = vld [vmem:[%s570 + $0x8] sm:$0xf]
    %v574 = vld [vmem:[%s570 + $0xc] sm:$0xf]
    %v575 = vld [vmem:[%s570 + $0x10] sm:$0xf]
    %v576 = vld [vmem:[%s570 + $0x14] sm:$0xf]
    %v577 = vld [vmem:[%s570 + $0x18] sm:$0xf]
    %v578 = vld [vmem:[%s570 + $0x1c] sm:$0xf]
    %v579 = vld [vmem:[%s570 + $0x20] sm:$0xf]
    %v580 = vld [vmem:[%s570 + $0x24] sm:$0xf]
    %v581 = vld [vmem:[%s570 + $0x28] sm:$0xf]
    %v582 = vld [vmem:[%s570 + $0x2c] sm:$0xf]
    %v583 = vld [vmem:[%s570 + $0x30] sm:$0xf]
    %v584 = vld [vmem:[%s570 + $0x34] sm:$0xf]
    %v585 = vld [vmem:[%s570 + $0x38] sm:$0xf]
    %v586 = vld [vmem:[%s570 + $0x3c] sm:$0xf]
    %s587 = scalar_lea.vmem [#allocation7], 6
    %v588 = vld [vmem:[%s587] sm:$0x1]
    %v590 = vperm.slane %v588, 0
    %v608 = vunpack.c.l.b16 %v571
    %v609 = vunpack.c.l.b16 %v572
    %v610 = vunpack.c.l.b16 %v573
    %v611 = vunpack.c.l.b16 %v574
    %v612 = vunpack.c.l.b16 %v575
    %v613 = vunpack.c.l.b16 %v576
    %v614 = vunpack.c.l.b16 %v577
    %v615 = vunpack.c.l.b16 %v578
    %v616 = vunpack.c.l.b16 %v579
    %v617 = vunpack.c.l.b16 %v580
    %v618 = vunpack.c.l.b16 %v581
    %v619 = vunpack.c.l.b16 %v582
    %v620 = vunpack.c.l.b16 %v583
    %v621 = vunpack.c.l.b16 %v584
    %v622 = vunpack.c.l.b16 %v585
    %v623 = vunpack.c.l.b16 %v586
    %v624 = vpack.c.b16 %v609, %v608
    %v625 = vpack.c.b16 %v611, %v610
    %v626 = vpack.c.b16 %v613, %v612
    %v627 = vpack.c.b16 %v615, %v614
    %v628 = vpack.c.b16 %v617, %v616
    %v629 = vpack.c.b16 %v619, %v618
    %v630 = vpack.c.b16 %v621, %v620
    %v631 = vpack.c.b16 %v623, %v622
    %640 = vmatpush.bf16.msra.mxu0 %v631
    %641 = vmatpush.bf16.msra.mxu0 %v630
    %642 = vmatpush.bf16.msra.mxu0 %v629
    %643 = vmatpush.bf16.msra.mxu0 %v628
    %644 = vmatpush.bf16.msra.mxu0 %v627
    %645 = vmatpush.bf16.msra.mxu0 %v626
    %646 = vmatpush.bf16.msra.mxu0 %v625
    %647 = vmatpush.bf16.msra.mxu0 %v624
    %648 = vmatmul.bf16.gmra.mxu0 %v569
    %v649 = vpop.f32.mrf.mxu0
    %v650 = vadd.f32 %v590, %v649
    %v651 = vpop.f32.mrf.mxu0
    %652 = vdwg.mxu0
    %v653 = vmax.f32 %v650, 0.0
    %v654 = vpack.c.bf16 %v653, %v653
    %s655 = scalar_lea.vmem [#allocation5], 448
    %v656 = vld [vmem:[%s655] sm:$0xf]
    %v657 = vld [vmem:[%s655 + $0x4] sm:$0xf]
    %v658 = vld [vmem:[%s655 + $0x8] sm:$0xf]
    %v659 = vld [vmem:[%s655 + $0xc] sm:$0xf]
    %v660 = vld [vmem:[%s655 + $0x10] sm:$0xf]
    %v661 = vld [vmem:[%s655 + $0x14] sm:$0xf]
    %v662 = vld [vmem:[%s655 + $0x18] sm:$0xf]
    %v663 = vld [vmem:[%s655 + $0x1c] sm:$0xf]
    %v664 = vld [vmem:[%s655 + $0x20] sm:$0xf]
    %v665 = vld [vmem:[%s655 + $0x24] sm:$0xf]
    %v666 = vld [vmem:[%s655 + $0x28] sm:$0xf]
    %v667 = vld [vmem:[%s655 + $0x2c] sm:$0xf]
    %v668 = vld [vmem:[%s655 + $0x30] sm:$0xf]
    %v669 = vld [vmem:[%s655 + $0x34] sm:$0xf]
    %v670 = vld [vmem:[%s655 + $0x38] sm:$0xf]
    %v671 = vld [vmem:[%s655 + $0x3c] sm:$0xf]
    %s672 = scalar_lea.vmem [#allocation7], 7
    %v673 = vld [vmem:[%s672] sm:$0x1]
    %v675 = vperm.slane %v673, 0
    %v693 = vunpack.c.l.b16 %v656
    %v694 = vunpack.c.l.b16 %v657
    %v695 = vunpack.c.l.b16 %v658
    %v696 = vunpack.c.l.b16 %v659
    %v697 = vunpack.c.l.b16 %v660
    %v698 = vunpack.c.l.b16 %v661
    %v699 = vunpack.c.l.b16 %v662
    %v700 = vunpack.c.l.b16 %v663
    %v701 = vunpack.c.l.b16 %v664
    %v702 = vunpack.c.l.b16 %v665
    %v703 = vunpack.c.l.b16 %v666
    %v704 = vunpack.c.l.b16 %v667
    %v705 = vunpack.c.l.b16 %v668
    %v706 = vunpack.c.l.b16 %v669
    %v707 = vunpack.c.l.b16 %v670
    %v708 = vunpack.c.l.b16 %v671
    %v709 = vpack.c.b16 %v694, %v693
    %v710 = vpack.c.b16 %v696, %v695
    %v711 = vpack.c.b16 %v698, %v697
    %v712 = vpack.c.b16 %v700, %v699
    %v713 = vpack.c.b16 %v702, %v701
    %v714 = vpack.c.b16 %v704, %v703
    %v715 = vpack.c.b16 %v706, %v705
    %v716 = vpack.c.b16 %v708, %v707
    %725 = vmatpush.bf16.msra.mxu0 %v716
    %726 = vmatpush.bf16.msra.mxu0 %v715
    %727 = vmatpush.bf16.msra.mxu0 %v714
    %728 = vmatpush.bf16.msra.mxu0 %v713
    %729 = vmatpush.bf16.msra.mxu0 %v712
    %730 = vmatpush.bf16.msra.mxu0 %v711
    %731 = vmatpush.bf16.msra.mxu0 %v710
    %732 = vmatpush.bf16.msra.mxu0 %v709
    %733 = vmatmul.bf16.gmra.mxu0 %v654
    %v734 = vpop.f32.mrf.mxu0
    %v735 = vadd.f32 %v675, %v734
    %v736 = vpop.f32.mrf.mxu0
    %737 = vdwg.mxu0
    %v738 = vmax.f32 %v735, 0.0
    %v739 = vpack.c.bf16 %v738, %v738
    %s740 = scalar_lea.vmem [#allocation5], 512
    %v741 = vld [vmem:[%s740] sm:$0xf]
    %v742 = vld [vmem:[%s740 + $0x4] sm:$0xf]
    %v743 = vld [vmem:[%s740 + $0x8] sm:$0xf]
    %v744 = vld [vmem:[%s740 + $0xc] sm:$0xf]
    %v745 = vld [vmem:[%s740 + $0x10] sm:$0xf]
    %v746 = vld [vmem:[%s740 + $0x14] sm:$0xf]
    %v747 = vld [vmem:[%s740 + $0x18] sm:$0xf]
    %v748 = vld [vmem:[%s740 + $0x1c] sm:$0xf]
    %v749 = vld [vmem:[%s740 + $0x20] sm:$0xf]
    %v750 = vld [vmem:[%s740 + $0x24] sm:$0xf]
    %v751 = vld [vmem:[%s740 + $0x28] sm:$0xf]
    %v752 = vld [vmem:[%s740 + $0x2c] sm:$0xf]
    %v753 = vld [vmem:[%s740 + $0x30] sm:$0xf]
    %v754 = vld [vmem:[%s740 + $0x34] sm:$0xf]
    %v755 = vld [vmem:[%s740 + $0x38] sm:$0xf]
    %v756 = vld [vmem:[%s740 + $0x3c] sm:$0xf]
    %s757 = scalar_lea.vmem [#allocation7], 8
    %v758 = vld [vmem:[%s757] sm:$0x1]
    %v760 = vperm.slane %v758, 0
    %v778 = vunpack.c.l.b16 %v741
    %v779 = vunpack.c.l.b16 %v742
    %v780 = vunpack.c.l.b16 %v743
    %v781 = vunpack.c.l.b16 %v744
    %v782 = vunpack.c.l.b16 %v745
    %v783 = vunpack.c.l.b16 %v746
    %v784 = vunpack.c.l.b16 %v747
    %v785 = vunpack.c.l.b16 %v748
    %v786 = vunpack.c.l.b16 %v749
    %v787 = vunpack.c.l.b16 %v750
    %v788 = vunpack.c.l.b16 %v751
    %v789 = vunpack.c.l.b16 %v752
    %v790 = vunpack.c.l.b16 %v753
    %v791 = vunpack.c.l.b16 %v754
    %v792 = vunpack.c.l.b16 %v755
    %v793 = vunpack.c.l.b16 %v756
    %v794 = vpack.c.b16 %v779, %v778
    %v795 = vpack.c.b16 %v781, %v780
    %v796 = vpack.c.b16 %v783, %v782
    %v797 = vpack.c.b16 %v785, %v784
    %v798 = vpack.c.b16 %v787, %v786
    %v799 = vpack.c.b16 %v789, %v788
    %v800 = vpack.c.b16 %v791, %v790
    %v801 = vpack.c.b16 %v793, %v792
    %810 = vmatpush.bf16.msra.mxu0 %v801
    %811 = vmatpush.bf16.msra.mxu0 %v800
    %812 = vmatpush.bf16.msra.mxu0 %v799
    %813 = vmatpush.bf16.msra.mxu0 %v798
    %814 = vmatpush.bf16.msra.mxu0 %v797
    %815 = vmatpush.bf16.msra.mxu0 %v796
    %816 = vmatpush.bf16.msra.mxu0 %v795
    %817 = vmatpush.bf16.msra.mxu0 %v794
    %818 = vmatmul.bf16.gmra.mxu0 %v739
    %v819 = vpop.f32.mrf.mxu0
    %v820 = vadd.f32 %v760, %v819
    %v821 = vpop.f32.mrf.mxu0
    %822 = vdwg.mxu0
    %823 = vst [vmem:[#allocation8] sm:$0xff] %v820
    // Predicated region
    $region26: #{tpu_custom_call.1} parent=1 // pred_check
      _
    $region27: #{tpu_custom_call.1} parent=1 // pred_check_branch
      %825 = sbr.rel (0) target = $region29
    $region28: #{tpu_custom_call.1} parent=1 // pred_region
      %827 = vsyncadd [#allocation4], 0
      %s829 = sshll.u32 [#allocation8], 4
      %s830 = int_to_ptr.vmem [resolvable:$true] %s829
      %s831 = sshll.u32 %s3, 4
      %s832 = int_to_ptr.hbm [resolvable:$true] %s831
      %834 = dma.vmem_to_hbm [thread:$0]  %s830, 128, %s832, [#allocation4]
    $region29: #{tpu_custom_call.1} parent=1 // pred_fallthru
      _
    // Predicated region
    $region30: #{tpu_custom_call.1} parent=1 // pred_check
      _
    $region31: #{tpu_custom_call.1} parent=1 // pred_check_branch
      %836 = sbr.rel (0) target = $region33
    $region32: #{tpu_custom_call.1} parent=1 // pred_region
      %838 = dma.done [#allocation4], 128
    $region33: #{tpu_custom_call.1} parent=1 // pred_fallthru
      _
    %839 = vsyncpa [#allocation3], 1
    %840 = vsyncpa [#allocation6], 1
    %841 = vsyncpa [#allocation4], 1

</llo_original>
